<compile_context>
chip_gen: v7x
topology: tpu7x:2x2x1
jax: 0.10.0
libtpu: 0.0.40
codegen_flags: <defaults>
</compile_context>

<pallas_src>
import jax
import jax.numpy as jnp
from jax import lax
from jax.experimental import pallas as pl
from jax.experimental.pallas import tpu as pltpu

LEAKY_SLOPE = 0.01  # nn.LeakyReLU default


def _leaky_relu(x):
    # max(x, slope*x): exact for 0 <= slope <= 1, vmul+vmax instead of cmp+select.
    return jnp.maximum(x, LEAKY_SLOPE * x)


# ----------------------------- fused Pallas kernel -----------------------------

def _gnn_fused_kernel(idx_ref,
                      xc_ref, a_ref, gw_ref, gb_ref,
                      xa_ref, aw_ref, ab_ref,
                      vw_ref, vb_ref,
                      value_ref, actor_ref,
                      hc_ref):
    # idx_ref  : SMEM (1,) int32        target node index (scalar prefetch)
    # xc_ref   : (N, Fc)  bf16          critic input for this batch element
    # a_ref    : (N, N)   bf16          D^-1/2 (A+I) D^-1/2 (resident, constant block)
    # gw_ref   : (Fc, H) bf16, gb_ref: (1, H) f32     GCNConv weight / bias
    # xa_ref   : (N, Fa)  bf16          actor input for this batch element
    # aw_ref   : (Fa, H) bf16, ab_ref: (1, H) f32     actor readout Linear
    # vw_ref   : (H, 1)  bf16, vb_ref: (1, 1) f32     critic_linear
    # value_ref: (1, 1)  f32 out        actor_ref: (N, H) f32 out
    # hc_ref   : (N, H)  f32 VMEM scratch (hidden_critic of this graph)

    # ---- critic branch: GCNConv + LeakyReLU ((A@X)@W order since Fc < H) ----
    ax = jnp.dot(a_ref[...], xc_ref[...], preferred_element_type=jnp.float32)  # (N, Fc)
    hc = _leaky_relu(
        jnp.dot(ax.astype(jnp.bfloat16), gw_ref[...],
                preferred_element_type=jnp.float32) + gb_ref[...])             # (N, H) f32
    hc_ref[...] = hc

    # ---- actor branch: Linear + LeakyReLU ----
    actor_ref[...] = _leaky_relu(
        jnp.dot(xa_ref[...], aw_ref[...], preferred_element_type=jnp.float32)
        + ab_ref[...]).astype(actor_ref.dtype)

    # ---- value head: dynamic row gather from the resident hidden_critic ----
    node_idx = idx_ref[0]
    row = hc_ref[pl.ds(node_idx, 1), :]                                        # (1, H)
    value_ref[...] = (
        jnp.dot(row.astype(jnp.bfloat16), vw_ref[...],
                preferred_element_type=jnp.float32) + vb_ref[...])             # (1, 1)


# ----------------------------- wrapper -----------------------------

def gnn_fused(node_index, x_critic, a_hat, gcn_w, gcn_b,
              x_actor, actor_w, actor_b, value_w, value_b):
    bs, n, fc = x_critic.shape
    fa = x_actor.shape[-1]
    h = gcn_w.shape[1]

    idx = jnp.asarray(node_index, jnp.int32).reshape(1)

    bf = jnp.bfloat16
    xc = x_critic.astype(bf)
    xa = x_actor.astype(bf)
    a = a_hat.astype(bf)
    gw = gcn_w.astype(bf)
    aw = actor_w.astype(bf)
    vw = value_w.astype(bf)
    gb = gcn_b.reshape(1, h).astype(jnp.float32)
    ab = actor_b.reshape(1, h).astype(jnp.float32)
    vb = value_b.reshape(1, 1).astype(jnp.float32)

    value3, hidden_actor = pl.pallas_call(
        _gnn_fused_kernel,
        out_shape=(jax.ShapeDtypeStruct((bs, 1, 1), jnp.float32),
                   jax.ShapeDtypeStruct((bs, n, h), jnp.float32)),
        grid_spec=pltpu.PrefetchScalarGridSpec(
            num_scalar_prefetch=1,
            grid=(bs,),
            in_specs=[
                # per-batch blocks (leading batch dim squeezed)
                pl.BlockSpec((None, n, fc), lambda b, _idx: (b, 0, 0)),   # x_critic
                # constant-block operands: DMA'd once, stay VMEM-resident
                pl.BlockSpec((n, n),        lambda b, _idx: (0, 0)),      # A_hat
                pl.BlockSpec((fc, h),       lambda b, _idx: (0, 0)),      # gcn_w
                pl.BlockSpec((1, h),        lambda b, _idx: (0, 0)),      # gcn_b
                pl.BlockSpec((None, n, fa), lambda b, _idx: (b, 0, 0)),   # x_actor
                pl.BlockSpec((fa, h),       lambda b, _idx: (0, 0)),      # actor_w
                pl.BlockSpec((1, h),        lambda b, _idx: (0, 0)),      # actor_b
                pl.BlockSpec((h, 1),        lambda b, _idx: (0, 0)),      # value_w
                pl.BlockSpec((1, 1),        lambda b, _idx: (0, 0)),      # value_b
            ],
            out_specs=[
                pl.BlockSpec((None, 1, 1), lambda b, _idx: (b, 0, 0)),    # value
                pl.BlockSpec((None, n, h), lambda b, _idx: (b, 0, 0)),    # hidden_actor
            ],
            scratch_shapes=[pltpu.VMEM((n, h), jnp.float32)],             # hidden_critic
        ),
        compiler_params=pltpu.CompilerParams(
            dimension_semantics=("parallel",),        # megacore-shardable on v7x
            vmem_limit_bytes=32 * 1024 * 1024),
    )(idx, xc, a, gw, gb, xa, aw, ab, vw, vb)

    return value3.reshape(bs, 1), hidden_actor


# ----------------------------- glue (plain JAX, precomputed once) -----------------------------

def gcn_norm_adj(edge_index, num_node):
    """Dense normalized adjacency D^{-1/2} (A + I) D^{-1/2}, matching GCNConv
    (source_to_target flow, add_self_loops=True, edge weights = 1)."""
    src = edge_index[0]
    dst = edge_index[1]
    a = jnp.zeros((num_node, num_node), jnp.float32).at[dst, src].add(1.0)
    a = a + jnp.eye(num_node, dtype=jnp.float32)
    deg = a.sum(axis=1)
    dinv = jnp.where(deg > 0, 1.0 / jnp.sqrt(deg), 0.0)
    return dinv[:, None] * a * dinv[None, :]


def init_params(key, num_inputs, type_num, condition_state_size, hidden_size):
    ks = jax.random.split(key, 6)
    fc = num_inputs + type_num
    fa = num_inputs + condition_state_size
    scale = 0.1
    return {
        # GCNConv(num_inputs + type_num, hidden)  (weight stored [in, out])
        "gcn_w": scale * jax.random.normal(ks[0], (fc, hidden_size), jnp.float32),
        "gcn_b": scale * jax.random.normal(ks[1], (hidden_size,), jnp.float32),
        # actor_readout: Linear(num_inputs + condition_state_size, hidden)
        "actor_w": scale * jax.random.normal(ks[2], (fa, hidden_size), jnp.float32),
        "actor_b": scale * jax.random.normal(ks[3], (hidden_size,), jnp.float32),
        # critic_linear: Linear(hidden, 1)
        "value_w": scale * jax.random.normal(ks[4], (hidden_size, 1), jnp.float32),
        "value_b": scale * jax.random.normal(ks[5], (1,), jnp.float32),
        # NOTE: critic_readout exists in __init__ but is unused in forward().
    }


def build_inputs(params, xs, condition_state, type_index, type_num):
    bs, num_node, _ = xs.shape
    # one-hot type, expanded over nodes, concatenated *before* xs (torch.cat order)
    toh = jax.nn.one_hot(type_index, type_num, dtype=xs.dtype)               # [bs, T]
    toh = jnp.broadcast_to(toh[:, None, :], (bs, num_node, type_num))
    x_critic = jnp.concatenate([toh, xs], axis=-1)                           # [bs, N, Fc]
    x_actor = jnp.concatenate([condition_state, xs], axis=-1)                # [bs, N, Fa]
    return x_critic, x_actor


def gnn_base_forward(params, xs, a_hat, condition_state, node_index, type_index, type_num):
    x_critic, x_actor = build_inputs(params, xs, condition_state, type_index, type_num)
    value, hidden_actor = gnn_fused(
        node_index, x_critic, a_hat,
        params["gcn_w"], params["gcn_b"],
        x_actor, params["actor_w"], params["actor_b"],
        params["value_w"], params["value_b"])
    return value, hidden_actor


def reference_forward(params, xs, a_hat, condition_state, node_index, type_index, type_num):
    """Pure-JAX f32 reference of GNNBase.forward (same graph for every batch element)."""
    x_critic, x_actor = build_inputs(params, xs, condition_state, type_index, type_num)
    hc = jnp.einsum("ij,bjf->bif", a_hat, x_critic)
    hc = jax.nn.leaky_relu(
        jnp.einsum("bif,fh->bih", hc, params["gcn_w"]) + params["gcn_b"], LEAKY_SLOPE)
    ha = jax.nn.leaky_relu(
        jnp.einsum("bif,fh->bih", x_actor, params["actor_w"]) + params["actor_b"], LEAKY_SLOPE)
    value = hc[:, node_index] @ params["value_w"] + params["value_b"]
    return value, ha


# ----------------------------- main -----------------------------

if __name__ == "__main__":
    bs = 2
    num_node = 8
    num_inputs = 6
    type_num = 4
    condition_state_size = 1
    hidden_size = 128   # padded to the 128-lane width (lane-dense stores, full MXU width)

    key = jax.random.PRNGKey(0)
    k_x, k_c, k_p = jax.random.split(key, 3)

    xs = jax.random.normal(k_x, (bs, num_node, num_inputs), jnp.float32)
    condition_state = jax.random.normal(
        k_c, (bs, num_node, condition_state_size), jnp.float32)

    # bidirectional ring graph on 8 nodes: 16 directed edges
    nodes = jnp.arange(num_node)
    nxt = (nodes + 1) % num_node
    edge_index = jnp.concatenate(
        [jnp.stack([nodes, nxt], axis=0), jnp.stack([nxt, nodes], axis=0)], axis=1
    ).astype(jnp.int32)                                                   # [2, 16]

    node_index = 3
    type_index = jnp.array([0, 2], dtype=jnp.int32)

    params = init_params(k_p, num_inputs, type_num, condition_state_size, hidden_size)

    # static graph preprocessing, hoisted out of the forward pass (N x N only — no block diag)
    a_hat = gcn_norm_adj(edge_index, num_node)                            # [N, N]

    value, hidden_actor = gnn_base_forward(
        params, xs, a_hat, condition_state, node_index, type_index, type_num)
    jax.block_until_ready((value, hidden_actor))

    assert value.shape == (bs, 1)
    assert hidden_actor.shape == (bs, num_node, hidden_size)

    # loose-tolerance check vs f32 reference (kernel MXU operands are bf16)
    ref_value, ref_actor = reference_forward(
        params, xs, a_hat, condition_state, node_index, type_index, type_num)
    assert jnp.allclose(value, ref_value, atol=3e-2, rtol=3e-2)
    assert jnp.allclose(hidden_actor, ref_actor, atol=3e-2, rtol=3e-2)

    print("KERNEL_OK")
</pallas_src>

<mosaic_0001>
module attributes {stable_mosaic.version = 11 : i64} {
  func.func @_gnn_fused_kernel(%arg0: i32, %arg1: memref<1xi32, #tpu.memory_space<smem>>, %arg2: memref<1x8x10xbf16, #tpu.memory_space<vmem>>, %arg3: memref<8x8xbf16, #tpu.memory_space<vmem>>, %arg4: memref<10x128xbf16, #tpu.memory_space<vmem>>, %arg5: memref<1x128xf32, #tpu.memory_space<vmem>>, %arg6: memref<1x8x7xbf16, #tpu.memory_space<vmem>>, %arg7: memref<7x128xbf16, #tpu.memory_space<vmem>>, %arg8: memref<1x128xf32, #tpu.memory_space<vmem>>, %arg9: memref<128x1xbf16, #tpu.memory_space<vmem>>, %arg10: memref<1x1xf32, #tpu.memory_space<vmem>>, %arg11: memref<1x1x1xf32, #tpu.memory_space<vmem>>, %arg12: memref<1x8x128xf32, #tpu.memory_space<vmem>>, %arg13: memref<8x128xf32, #tpu.memory_space<vmem>>) attributes {dimension_semantics = [#tpu.dimension_semantics<parallel>], iteration_bounds = array<i64: 2>, scalar_prefetch = 1 : i64, scratch_operands = 1 : i64, tpu.core_type = #tpu.core_type<tc>, window_params = [{transform_indices = @transform_0, window_bounds = array<i64: 1, 8, 10>}, {pipeline_mode = #tpu.pipeline_mode<synchronous>, transform_indices = @transform_1, window_bounds = array<i64: 8, 8>}, {pipeline_mode = #tpu.pipeline_mode<synchronous>, transform_indices = @transform_2, window_bounds = array<i64: 10, 128>}, {pipeline_mode = #tpu.pipeline_mode<synchronous>, transform_indices = @transform_3, window_bounds = array<i64: 1, 128>}, {transform_indices = @transform_4, window_bounds = array<i64: 1, 8, 7>}, {pipeline_mode = #tpu.pipeline_mode<synchronous>, transform_indices = @transform_5, window_bounds = array<i64: 7, 128>}, {pipeline_mode = #tpu.pipeline_mode<synchronous>, transform_indices = @transform_6, window_bounds = array<i64: 1, 128>}, {pipeline_mode = #tpu.pipeline_mode<synchronous>, transform_indices = @transform_7, window_bounds = array<i64: 128, 1>}, {pipeline_mode = #tpu.pipeline_mode<synchronous>, transform_indices = @transform_8, window_bounds = array<i64: 1, 1>}, {transform_indices = @transform_9, window_bounds = array<i64: 1, 1, 1>}, {transform_indices = @transform_10, window_bounds = array<i64: 1, 8, 128>}]} {
    %c0 = arith.constant 0 : index
    %c0_0 = arith.constant 0 : index
    %0 = vector.load %arg3[%c0, %c0_0] : memref<8x8xbf16, #tpu.memory_space<vmem>>, vector<8x8xbf16>
    %c0_1 = arith.constant 0 : index
    %c0_2 = arith.constant 0 : index
    %c0_3 = arith.constant 0 : index
    %1 = vector.load %arg2[%c0_1, %c0_2, %c0_3] : memref<1x8x10xbf16, #tpu.memory_space<vmem>>, vector<1x8x10xbf16>
    %2 = vector.shape_cast %1 : vector<1x8x10xbf16> to vector<8x10xbf16>
    %cst = arith.constant dense<0.000000e+00> : vector<8x10xf32>
    %3 = tpu.matmul %0, %2, %cst {dimension_numbers = #tpu.dot_dimension_numbers<[1], [0], [0], [1], [0, 0, 1, 1], [], []>} : vector<8x8xbf16>, vector<8x10xbf16>, vector<8x10xf32> -> vector<8x10xf32>
    %4 = arith.truncf %3 : vector<8x10xf32> to vector<8x10xbf16>
    %c0_4 = arith.constant 0 : index
    %c0_5 = arith.constant 0 : index
    %5 = vector.load %arg4[%c0_4, %c0_5] : memref<10x128xbf16, #tpu.memory_space<vmem>>, vector<10x128xbf16>
    %cst_6 = arith.constant dense<0.000000e+00> : vector<8x128xf32>
    %6 = tpu.matmul %4, %5, %cst_6 {dimension_numbers = #tpu.dot_dimension_numbers<[1], [0], [0], [1], [0, 0, 1, 1], [], []>} : vector<8x10xbf16>, vector<10x128xbf16>, vector<8x128xf32> -> vector<8x128xf32>
    %c0_7 = arith.constant 0 : index
    %c0_8 = arith.constant 0 : index
    %7 = vector.load %arg5[%c0_7, %c0_8] : memref<1x128xf32, #tpu.memory_space<vmem>>, vector<1x128xf32>
    %8 = vector.broadcast %7 : vector<1x128xf32> to vector<8x128xf32>
    %9 = arith.addf %6, %8 : vector<8x128xf32>
    %cst_9 = arith.constant 0.00999999977 : f32
    %10 = vector.broadcast %cst_9 : f32 to vector<8x128xf32>
    %11 = arith.mulf %10, %9 : vector<8x128xf32>
    %12 = arith.maximumf %9, %11 : vector<8x128xf32>
    %c0_10 = arith.constant 0 : index
    %c0_11 = arith.constant 0 : index
    %13 = vector.load %arg13[%c0_10, %c0_11] : memref<8x128xf32, #tpu.memory_space<vmem>>, vector<8x128xf32>
    tpu.vector_store %arg13[%c0_10, %c0_11], %12 {strides = array<i32>} : memref<8x128xf32, #tpu.memory_space<vmem>>, vector<8x128xf32>,
    %c0_12 = arith.constant 0 : index
    %c0_13 = arith.constant 0 : index
    %c0_14 = arith.constant 0 : index
    %14 = vector.load %arg6[%c0_12, %c0_13, %c0_14] : memref<1x8x7xbf16, #tpu.memory_space<vmem>>, vector<1x8x7xbf16>
    %15 = vector.shape_cast %14 : vector<1x8x7xbf16> to vector<8x7xbf16>
    %c0_15 = arith.constant 0 : index
    %c0_16 = arith.constant 0 : index
    %16 = vector.load %arg7[%c0_15, %c0_16] : memref<7x128xbf16, #tpu.memory_space<vmem>>, vector<7x128xbf16>
    %cst_17 = arith.constant dense<0.000000e+00> : vector<8x128xf32>
    %17 = tpu.matmul %15, %16, %cst_17 {dimension_numbers = #tpu.dot_dimension_numbers<[1], [0], [0], [1], [0, 0, 1, 1], [], []>} : vector<8x7xbf16>, vector<7x128xbf16>, vector<8x128xf32> -> vector<8x128xf32>
    %c0_18 = arith.constant 0 : index
    %c0_19 = arith.constant 0 : index
    %18 = vector.load %arg8[%c0_18, %c0_19] : memref<1x128xf32, #tpu.memory_space<vmem>>, vector<1x128xf32>
    %19 = vector.broadcast %18 : vector<1x128xf32> to vector<8x128xf32>
    %20 = arith.addf %17, %19 : vector<8x128xf32>
    %cst_20 = arith.constant 0.00999999977 : f32
    %21 = vector.broadcast %cst_20 : f32 to vector<8x128xf32>
    %22 = arith.mulf %21, %20 : vector<8x128xf32>
    %23 = arith.maximumf %20, %22 : vector<8x128xf32>
    %c0_21 = arith.constant 0 : index
    %c0_22 = arith.constant 0 : index
    %c0_23 = arith.constant 0 : index
    %24 = vector.load %arg12[%c0_21, %c0_22, %c0_23] : memref<1x8x128xf32, #tpu.memory_space<vmem>>, vector<1x8x128xf32>
    %25 = vector.shape_cast %24 : vector<1x8x128xf32> to vector<8x128xf32>
    %26 = vector.shape_cast %23 : vector<8x128xf32> to vector<1x8x128xf32>
    tpu.vector_store %arg12[%c0_21, %c0_22, %c0_23], %26 {strides = array<i32>} : memref<1x8x128xf32, #tpu.memory_space<vmem>>, vector<1x8x128xf32>,
    %c0_24 = arith.constant 0 : index
    %27 = memref.load %arg1[%c0_24] : memref<1xi32, #tpu.memory_space<smem>>
    %28 = arith.index_cast %27 : i32 to index
    %c0_25 = arith.constant 0 : index
    %29 = vector.load %arg13[%28, %c0_25] : memref<8x128xf32, #tpu.memory_space<vmem>>, vector<1x128xf32>
    %30 = arith.truncf %29 : vector<1x128xf32> to vector<1x128xbf16>
    %c0_26 = arith.constant 0 : index
    %c0_27 = arith.constant 0 : index
    %31 = vector.load %arg9[%c0_26, %c0_27] : memref<128x1xbf16, #tpu.memory_space<vmem>>, vector<128x1xbf16>
    %cst_28 = arith.constant dense<0.000000e+00> : vector<1x1xf32>
    %32 = tpu.matmul %30, %31, %cst_28 {dimension_numbers = #tpu.dot_dimension_numbers<[1], [0], [0], [1], [0, 0, 1, 1], [], []>} : vector<1x128xbf16>, vector<128x1xbf16>, vector<1x1xf32> -> vector<1x1xf32>
    %c0_29 = arith.constant 0 : index
    %c0_30 = arith.constant 0 : index
    %33 = vector.load %arg10[%c0_29, %c0_30] : memref<1x1xf32, #tpu.memory_space<vmem>>, vector<1x1xf32>
    %34 = arith.addf %32, %33 : vector<1x1xf32>
    %c0_31 = arith.constant 0 : index
    %c0_32 = arith.constant 0 : index
    %c0_33 = arith.constant 0 : index
    %35 = vector.load %arg11[%c0_31, %c0_32, %c0_33] : memref<1x1x1xf32, #tpu.memory_space<vmem>>, vector<1x1x1xf32>
    %36 = vector.shape_cast %35 : vector<1x1x1xf32> to vector<1x1xf32>
    %37 = vector.shape_cast %34 : vector<1x1xf32> to vector<1x1x1xf32>
    tpu.vector_store %arg11[%c0_31, %c0_32, %c0_33], %37 {strides = array<i32>} : memref<1x1x1xf32, #tpu.memory_space<vmem>>, vector<1x1x1xf32>,
    return
  }
  func.func @transform_0(%arg0: i32, %arg1: memref<1xi32, #tpu.memory_space<smem>>) -> (i32, i32, i32) {
    %c0_i32 = arith.constant 0 : i32
    %c0_i32_0 = arith.constant 0 : i32
    %c0_i32_1 = arith.constant 0 : i32
    return %arg0, %c0_i32, %c0_i32_0 : i32, i32, i32
  }
  func.func @transform_1(%arg0: i32, %arg1: memref<1xi32, #tpu.memory_space<smem>>) -> (i32, i32) {
    %c0_i32 = arith.constant 0 : i32
    %c0_i32_0 = arith.constant 0 : i32
    %c0_i32_1 = arith.constant 0 : i32
    return %c0_i32, %c0_i32_0 : i32, i32
  }
  func.func @transform_2(%arg0: i32, %arg1: memref<1xi32, #tpu.memory_space<smem>>) -> (i32, i32) {
    %c0_i32 = arith.constant 0 : i32
    %c0_i32_0 = arith.constant 0 : i32
    %c0_i32_1 = arith.constant 0 : i32
    return %c0_i32, %c0_i32_0 : i32, i32
  }
  func.func @transform_3(%arg0: i32, %arg1: memref<1xi32, #tpu.memory_space<smem>>) -> (i32, i32) {
    %c0_i32 = arith.constant 0 : i32
    %c0_i32_0 = arith.constant 0 : i32
    %c0_i32_1 = arith.constant 0 : i32
    return %c0_i32, %c0_i32_0 : i32, i32
  }
  func.func @transform_4(%arg0: i32, %arg1: memref<1xi32, #tpu.memory_space<smem>>) -> (i32, i32, i32) {
    %c0_i32 = arith.constant 0 : i32
    %c0_i32_0 = arith.constant 0 : i32
    %c0_i32_1 = arith.constant 0 : i32
    return %arg0, %c0_i32, %c0_i32_0 : i32, i32, i32
  }
  func.func @transform_5(%arg0: i32, %arg1: memref<1xi32, #tpu.memory_space<smem>>) -> (i32, i32) {
    %c0_i32 = arith.constant 0 : i32
    %c0_i32_0 = arith.constant 0 : i32
    %c0_i32_1 = arith.constant 0 : i32
    return %c0_i32, %c0_i32_0 : i32, i32
  }
  func.func @transform_6(%arg0: i32, %arg1: memref<1xi32, #tpu.memory_space<smem>>) -> (i32, i32) {
    %c0_i32 = arith.constant 0 : i32
    %c0_i32_0 = arith.constant 0 : i32
    %c0_i32_1 = arith.constant 0 : i32
    return %c0_i32, %c0_i32_0 : i32, i32
  }
  func.func @transform_7(%arg0: i32, %arg1: memref<1xi32, #tpu.memory_space<smem>>) -> (i32, i32) {
    %c0_i32 = arith.constant 0 : i32
    %c0_i32_0 = arith.constant 0 : i32
    %c0_i32_1 = arith.constant 0 : i32
    return %c0_i32, %c0_i32_0 : i32, i32
  }
  func.func @transform_8(%arg0: i32, %arg1: memref<1xi32, #tpu.memory_space<smem>>) -> (i32, i32) {
    %c0_i32 = arith.constant 0 : i32
    %c0_i32_0 = arith.constant 0 : i32
    %c0_i32_1 = arith.constant 0 : i32
    return %c0_i32, %c0_i32_0 : i32, i32
  }
  func.func @transform_9(%arg0: i32, %arg1: memref<1xi32, #tpu.memory_space<smem>>) -> (i32, i32, i32) {
    %c0_i32 = arith.constant 0 : i32
    %c0_i32_0 = arith.constant 0 : i32
    %c0_i32_1 = arith.constant 0 : i32
    return %arg0, %c0_i32, %c0_i32_0 : i32, i32, i32
  }
  func.func @transform_10(%arg0: i32, %arg1: memref<1xi32, #tpu.memory_space<smem>>) -> (i32, i32, i32) {
    %c0_i32 = arith.constant 0 : i32
    %c0_i32_0 = arith.constant 0 : i32
    %c0_i32_1 = arith.constant 0 : i32
    return %arg0, %c0_i32, %c0_i32_0 : i32, i32, i32
  }
}

</mosaic_0001>

<llo_original>
// kernel: tpu_custom_call.1
$region0: #{tpu_custom_call.1}
  #allocation0 [shape = 'u32[]', space=smem, size = 0x4, offset = 0x4, fixed_abs, tag = 'smem constant byte address 0x4 - core index']
  #allocation1 [shape = 'u32[144,128]{1,0:T(1,128)}', space=vmem, size = 0x12000, scoped, tag = 'internal scratch']
  #allocation2 [shape = 'f32[8,128]{1,0:T(8,128)}', space=vmem, size = 0x1000, scoped, tag = 'scratch operand']
  #allocation3 [shape = 's32[1]{0}', space=sflag, size = 0x4, scoped, tag = 'scoped memory for tpu_custom_call.1']
  #allocation4 [shape = 's32[1]{0:T(128)S(6)}', space=smem, size = 0x200, scoped, tag = 'prefetched SMEM operand 0']
  #allocation5 [shape = 'f32[1,1]{1,0:T(1,128)S(1)}', space=vmem, size = 0x200, scoped, tag = 'scoped memory for tpu_custom_call.1']
  %s0 = inlined_call_operand.<no memory space> [shape: s32[1], index: 0, kind: input, shape index: {}]
  %s1 = inlined_call_operand.vmem [shape: bf16[2,8,10], index: 1, kind: input, shape index: {}]
  %s2 = inlined_call_operand.vmem [shape: bf16[8,8], index: 2, kind: input, shape index: {}]
  %s3 = inlined_call_operand.vmem [shape: bf16[10,128], index: 3, kind: input, shape index: {}]
  %s4 = inlined_call_operand.vmem [shape: f32[1,128], index: 4, kind: input, shape index: {}]
  %s5 = inlined_call_operand.vmem [shape: bf16[2,8,7], index: 5, kind: input, shape index: {}]
  %s6 = inlined_call_operand.vmem [shape: bf16[7,128], index: 6, kind: input, shape index: {}]
  %s7 = inlined_call_operand.vmem [shape: f32[1,128], index: 7, kind: input, shape index: {}]
  %s8 = inlined_call_operand.vmem [shape: bf16[128,1], index: 8, kind: input, shape index: {}]
  %s9 = inlined_call_operand.<no memory space> [shape: f32[1,1], index: 9, kind: input, shape index: {}]
  %s10 = inlined_call_operand.vmem [shape: f32[2,1,1], index: 10, kind: output, shape index: {0}]
  %s11 = inlined_call_operand.hbm [shape: f32[2,8,128], index: 11, kind: output, shape index: {1}]
  %12 = xla_tuple %s10, %s11
  %s13 = sld [smem:[#allocation0]]
  $region77: #{tpu_custom_call.1} parent=0
    _
  %s15 = ssub.s32 1, %s13
  %s16 = scalar_select 0, %s15, %s13
  %17 = sst [smem:[#allocation4]] %s0
  %v18 = vstv %s9
  %19 = vst [vmem:[#allocation5] sm:$0x1] %v18
  $region1: #{tpu_custom_call.1} parent=0
    #allocation6 [shape = 'u8[8192]{0}', space=vmem, size = 0x2000, scoped, tag = 'output window, operand 1']
    #allocation7 [shape = 's32[2]{0}', space=sflag, size = 0x8, scoped, tag = 'scoped memory for tpu_custom_call.1']
    %20 = vsyncpa [#allocation7], 0
    %s21 = scalar_lea.sflag [#allocation7], 1
    %22 = vsyncpa %s21, 0
    loop: start=0, step=1, limit=4
    $region2: #{tpu_custom_call.1} parent=1 // loop_pre_header
      _
    $region3: #{tpu_custom_call.1} parent=1 // loop_header
      %s24 = sphi 0, %s28
      %p25 = scmp.ge.s32.totalorder %s24, 4
      %s34 = sphi 0, %s36
      %s37 = sphi 0, %s34
      %s38 = sphi 0, %s37
      %s54 = sphi 0, %s38
      %s58 = sphi 0, %s58
      %s60 = sphi 0, %s58
      %s61 = sphi 0, %s60
      %s75 = sphi 0, %s61
      %s79 = sphi 0, %s79
      %s81 = sphi 0, %s79
      %s82 = sphi 0, %s81
      %s96 = sphi 0, %s82
      %s100 = sphi 0, %s100
      %s102 = sphi 0, %s100
      %s103 = sphi 0, %s102
      %s117 = sphi 0, %s103
      %s123 = sphi 0, %s125
      %s126 = sphi 0, %s123
      %s127 = sphi 0, %s126
      %s143 = sphi 0, %s127
      %s147 = sphi 0, %s147
      %s149 = sphi 0, %s147
      %s150 = sphi 0, %s149
      %s164 = sphi 0, %s150
      %s168 = sphi 0, %s168
      %s170 = sphi 0, %s168
      %s171 = sphi 0, %s170
      %s185 = sphi 0, %s171
      %s189 = sphi 0, %s189
      %s191 = sphi 0, %s189
      %s192 = sphi 0, %s191
      %s206 = sphi 0, %s192
      %s210 = sphi 0, %s210
      %s212 = sphi 0, %s210
      %s213 = sphi 0, %s212
      %s227 = sphi 0, %s213
      %s233 = sphi 0, %s235
      %s236 = sphi 0, %s233
      %s237 = sphi 0, %s236
      %s253 = sphi 0, %s237
      %s259 = sphi 0, %s261
      %s262 = sphi 0, %s259
      %s263 = sphi 0, %s262
      %s279 = sphi 0, %s263
    $region4: #{tpu_custom_call.1} parent=1 // loop_header_branch
      %27 = sbr.rel (%p25) target = $region8
    $region5: #{tpu_custom_call.1} parent=1 // loop_body
      %s29 = ssub.s32 %s24, 1
      %s30 = ssub.s32 %s24, 2
      %s31 = sadd.s32 %s24, 1
      %s32 = ssub.s32 %s24, %s31
      %p33 = scmp.eq.s32.totalorder %s32, 0
      %s35 = sadd.s32 %s34, 1
      %s36 = scalar_select %p33, %s34, %s35
      %p39 = pneg %p33
      %p40 = scmp.eq.s32.totalorder %s24, 1
      %p41 = por %p39, %p40
      %p42 = scmp.ne.s32.totalorder %s34, %s37
      %p43 = scmp.eq.s32.totalorder %s24, 0
      %p44 = por %p42, %p43
      %p45 = scmp.ne.s32.totalorder %s34, %s37
      %p46 = scmp.eq.s32.totalorder %s29, 1
      %p47 = por %p45, %p46
      %p48 = scmp.ne.s32.totalorder %s37, %s38
      %p49 = scmp.eq.s32.totalorder %s29, 0
      %p50 = por %p48, %p49
      %p51 = scmp.ne.s32.totalorder %s37, %s38
      %p52 = scmp.eq.s32.totalorder %s30, 1
      %p53 = por %p51, %p52
      %p55 = scmp.ne.s32.totalorder %s38, %s54
      %p56 = scmp.eq.s32.totalorder %s30, 0
      %p57 = por %p55, %p56
      %s59 = sadd.s32 %s58, 1
      %p62 = scmp.eq.s32.totalorder %s24, 1
      %p63 = scmp.ne.s32.totalorder %s58, %s60
      %p64 = scmp.eq.s32.totalorder %s24, 0
      %p65 = por %p63, %p64
      %p66 = scmp.ne.s32.totalorder %s58, %s60
      %p67 = scmp.eq.s32.totalorder %s29, 1
      %p68 = por %p66, %p67
      %p69 = scmp.ne.s32.totalorder %s60, %s61
      %p70 = scmp.eq.s32.totalorder %s29, 0
      %p71 = por %p69, %p70
      %p72 = scmp.ne.s32.totalorder %s60, %s61
      %p73 = scmp.eq.s32.totalorder %s30, 1
      %p74 = por %p72, %p73
      %p76 = scmp.ne.s32.totalorder %s61, %s75
      %p77 = scmp.eq.s32.totalorder %s30, 0
      %p78 = por %p76, %p77
      %s80 = sadd.s32 %s79, 1
      %p83 = scmp.eq.s32.totalorder %s24, 1
      %p84 = scmp.ne.s32.totalorder %s79, %s81
      %p85 = scmp.eq.s32.totalorder %s24, 0
      %p86 = por %p84, %p85
      %p87 = scmp.ne.s32.totalorder %s79, %s81
      %p88 = scmp.eq.s32.totalorder %s29, 1
      %p89 = por %p87, %p88
      %p90 = scmp.ne.s32.totalorder %s81, %s82
      %p91 = scmp.eq.s32.totalorder %s29, 0
      %p92 = por %p90, %p91
      %p93 = scmp.ne.s32.totalorder %s81, %s82
      %p94 = scmp.eq.s32.totalorder %s30, 1
      %p95 = por %p93, %p94
      %p97 = scmp.ne.s32.totalorder %s82, %s96
      %p98 = scmp.eq.s32.totalorder %s30, 0
      %p99 = por %p97, %p98
      %s101 = sadd.s32 %s100, 1
      %p104 = scmp.eq.s32.totalorder %s24, 1
      %p105 = scmp.ne.s32.totalorder %s100, %s102
      %p106 = scmp.eq.s32.totalorder %s24, 0
      %p107 = por %p105, %p106
      %p108 = scmp.ne.s32.totalorder %s100, %s102
      %p109 = scmp.eq.s32.totalorder %s29, 1
      %p110 = por %p108, %p109
      %p111 = scmp.ne.s32.totalorder %s102, %s103
      %p112 = scmp.eq.s32.totalorder %s29, 0
      %p113 = por %p111, %p112
      %p114 = scmp.ne.s32.totalorder %s102, %s103
      %p115 = scmp.eq.s32.totalorder %s30, 1
      %p116 = por %p114, %p115
      %p118 = scmp.ne.s32.totalorder %s103, %s117
      %p119 = scmp.eq.s32.totalorder %s30, 0
      %p120 = por %p118, %p119
      %s121 = ssub.s32 %s24, %s31
      %p122 = scmp.eq.s32.totalorder %s121, 0
      %s124 = sadd.s32 %s123, 1
      %s125 = scalar_select %p122, %s123, %s124
      %p128 = pneg %p122
      %p129 = scmp.eq.s32.totalorder %s24, 1
      %p130 = por %p128, %p129
      %p131 = scmp.ne.s32.totalorder %s123, %s126
      %p132 = scmp.eq.s32.totalorder %s24, 0
      %p133 = por %p131, %p132
      %p134 = scmp.ne.s32.totalorder %s123, %s126
      %p135 = scmp.eq.s32.totalorder %s29, 1
      %p136 = por %p134, %p135
      %p137 = scmp.ne.s32.totalorder %s126, %s127
      %p138 = scmp.eq.s32.totalorder %s29, 0
      %p139 = por %p137, %p138
      %p140 = scmp.ne.s32.totalorder %s126, %s127
      %p141 = scmp.eq.s32.totalorder %s30, 1
      %p142 = por %p140, %p141
      %p144 = scmp.ne.s32.totalorder %s127, %s143
      %p145 = scmp.eq.s32.totalorder %s30, 0
      %p146 = por %p144, %p145
      %s148 = sadd.s32 %s147, 1
      %p151 = scmp.eq.s32.totalorder %s24, 1
      %p152 = scmp.ne.s32.totalorder %s147, %s149
      %p153 = scmp.eq.s32.totalorder %s24, 0
      %p154 = por %p152, %p153
      %p155 = scmp.ne.s32.totalorder %s147, %s149
      %p156 = scmp.eq.s32.totalorder %s29, 1
      %p157 = por %p155, %p156
      %p158 = scmp.ne.s32.totalorder %s149, %s150
      %p159 = scmp.eq.s32.totalorder %s29, 0
      %p160 = por %p158, %p159
      %p161 = scmp.ne.s32.totalorder %s149, %s150
      %p162 = scmp.eq.s32.totalorder %s30, 1
      %p163 = por %p161, %p162
      %p165 = scmp.ne.s32.totalorder %s150, %s164
      %p166 = scmp.eq.s32.totalorder %s30, 0
      %p167 = por %p165, %p166
      %s169 = sadd.s32 %s168, 1
      %p172 = scmp.eq.s32.totalorder %s24, 1
      %p173 = scmp.ne.s32.totalorder %s168, %s170
      %p174 = scmp.eq.s32.totalorder %s24, 0
      %p175 = por %p173, %p174
      %p176 = scmp.ne.s32.totalorder %s168, %s170
      %p177 = scmp.eq.s32.totalorder %s29, 1
      %p178 = por %p176, %p177
      %p179 = scmp.ne.s32.totalorder %s170, %s171
      %p180 = scmp.eq.s32.totalorder %s29, 0
      %p181 = por %p179, %p180
      %p182 = scmp.ne.s32.totalorder %s170, %s171
      %p183 = scmp.eq.s32.totalorder %s30, 1
      %p184 = por %p182, %p183
      %p186 = scmp.ne.s32.totalorder %s171, %s185
      %p187 = scmp.eq.s32.totalorder %s30, 0
      %p188 = por %p186, %p187
      %s190 = sadd.s32 %s189, 1
      %p193 = scmp.eq.s32.totalorder %s24, 1
      %p194 = scmp.ne.s32.totalorder %s189, %s191
      %p195 = scmp.eq.s32.totalorder %s24, 0
      %p196 = por %p194, %p195
      %p197 = scmp.ne.s32.totalorder %s189, %s191
      %p198 = scmp.eq.s32.totalorder %s29, 1
      %p199 = por %p197, %p198
      %p200 = scmp.ne.s32.totalorder %s191, %s192
      %p201 = scmp.eq.s32.totalorder %s29, 0
      %p202 = por %p200, %p201
      %p203 = scmp.ne.s32.totalorder %s191, %s192
      %p204 = scmp.eq.s32.totalorder %s30, 1
      %p205 = por %p203, %p204
      %p207 = scmp.ne.s32.totalorder %s192, %s206
      %p208 = scmp.eq.s32.totalorder %s30, 0
      %p209 = por %p207, %p208
      %s211 = sadd.s32 %s210, 1
      %p214 = scmp.eq.s32.totalorder %s24, 1
      %p215 = scmp.ne.s32.totalorder %s210, %s212
      %p216 = scmp.eq.s32.totalorder %s24, 0
      %p217 = por %p215, %p216
      %p218 = scmp.ne.s32.totalorder %s210, %s212
      %p219 = scmp.eq.s32.totalorder %s29, 1
      %p220 = por %p218, %p219
      %p221 = scmp.ne.s32.totalorder %s212, %s213
      %p222 = scmp.eq.s32.totalorder %s29, 0
      %p223 = por %p221, %p222
      %p224 = scmp.ne.s32.totalorder %s212, %s213
      %p225 = scmp.eq.s32.totalorder %s30, 1
      %p226 = por %p224, %p225
      %p228 = scmp.ne.s32.totalorder %s213, %s227
      %p229 = scmp.eq.s32.totalorder %s30, 0
      %p230 = por %p228, %p229
      %s231 = ssub.s32 %s24, %s31
      %p232 = scmp.eq.s32.totalorder %s231, 0
      %s234 = sadd.s32 %s233, 1
      %s235 = scalar_select %p232, %s233, %s234
      %p238 = pneg %p232
      %p239 = scmp.eq.s32.totalorder %s24, 1
      %p240 = por %p238, %p239
      %p241 = scmp.ne.s32.totalorder %s233, %s236
      %p242 = scmp.eq.s32.totalorder %s24, 0
      %p243 = por %p241, %p242
      %p244 = scmp.ne.s32.totalorder %s233, %s236
      %p245 = scmp.eq.s32.totalorder %s29, 1
      %p246 = por %p244, %p245
      %p247 = scmp.ne.s32.totalorder %s236, %s237
      %p248 = scmp.eq.s32.totalorder %s29, 0
      %p249 = por %p247, %p248
      %p250 = scmp.ne.s32.totalorder %s236, %s237
      %p251 = scmp.eq.s32.totalorder %s30, 1
      %p252 = por %p250, %p251
      %p254 = scmp.ne.s32.totalorder %s237, %s253
      %p255 = scmp.eq.s32.totalorder %s30, 0
      %p256 = por %p254, %p255
      %s257 = ssub.s32 %s24, %s31
      %p258 = scmp.eq.s32.totalorder %s257, 0
      %s260 = sadd.s32 %s259, 1
      %s261 = scalar_select %p258, %s259, %s260
      %p264 = pneg %p258
      %p265 = scmp.eq.s32.totalorder %s24, 1
      %p266 = por %p264, %p265
      %p267 = scmp.ne.s32.totalorder %s259, %s262
      %p268 = scmp.eq.s32.totalorder %s24, 0
      %p269 = por %p267, %p268
      %p270 = scmp.ne.s32.totalorder %s259, %s262
      %p271 = scmp.eq.s32.totalorder %s29, 1
      %p272 = por %p270, %p271
      %p273 = scmp.ne.s32.totalorder %s262, %s263
      %p274 = scmp.eq.s32.totalorder %s29, 0
      %p275 = por %p273, %p274
      %p276 = scmp.ne.s32.totalorder %s262, %s263
      %p277 = scmp.eq.s32.totalorder %s30, 1
      %p278 = por %p276, %p277
      %p280 = scmp.ne.s32.totalorder %s263, %s279
      %p281 = scmp.eq.s32.totalorder %s30, 0
      %p282 = por %p280, %p281
      %p283 = scmp.le.s32.totalorder 1, %s24
      %p284 = scmp.lt.s32.totalorder %s24, 3
      %p285 = pnand %p283, %p284
      %p286 = pneg %p285
      // Predicated region
      $region9: #{tpu_custom_call.1} parent=5 // pred_check
        _
      $region10: #{tpu_custom_call.1} parent=5 // pred_check_branch
        %288 = sbr.rel (%p285) target = $region12
      $region11: #{tpu_custom_call.1} parent=5 // pred_region
        %s289 = ssub.s32 %s24, 1
        // Predicated region
        $region13: #{tpu_custom_call.1} parent=11 // pred_check
          %p290 = pneg %p71
        $region14: #{tpu_custom_call.1} parent=11 // pred_check_branch
          %292 = sbr.rel (%p290) target = $region16
        $region15: #{tpu_custom_call.1} parent=11 // pred_region
          _
        $region16: #{tpu_custom_call.1} parent=11 // pred_fallthru
          _
        // Predicated region
        $region17: #{tpu_custom_call.1} parent=11 // pred_check
          %p293 = pneg %p92
        $region18: #{tpu_custom_call.1} parent=11 // pred_check_branch
          %295 = sbr.rel (%p293) target = $region20
        $region19: #{tpu_custom_call.1} parent=11 // pred_region
          _
        $region20: #{tpu_custom_call.1} parent=11 // pred_fallthru
          _
        // Predicated region
        $region21: #{tpu_custom_call.1} parent=11 // pred_check
          %p296 = pneg %p113
        $region22: #{tpu_custom_call.1} parent=11 // pred_check_branch
          %298 = sbr.rel (%p296) target = $region24
        $region23: #{tpu_custom_call.1} parent=11 // pred_region
          _
        $region24: #{tpu_custom_call.1} parent=11 // pred_fallthru
          _
        // Predicated region
        $region25: #{tpu_custom_call.1} parent=11 // pred_check
          %p299 = pneg %p160
        $region26: #{tpu_custom_call.1} parent=11 // pred_check_branch
          %301 = sbr.rel (%p299) target = $region28
        $region27: #{tpu_custom_call.1} parent=11 // pred_region
          _
        $region28: #{tpu_custom_call.1} parent=11 // pred_fallthru
          _
        // Predicated region
        $region29: #{tpu_custom_call.1} parent=11 // pred_check
          %p302 = pneg %p181
        $region30: #{tpu_custom_call.1} parent=11 // pred_check_branch
          %304 = sbr.rel (%p302) target = $region32
        $region31: #{tpu_custom_call.1} parent=11 // pred_region
          _
        $region32: #{tpu_custom_call.1} parent=11 // pred_fallthru
          _
        // Predicated region
        $region33: #{tpu_custom_call.1} parent=11 // pred_check
          %p305 = pneg %p202
        $region34: #{tpu_custom_call.1} parent=11 // pred_check_branch
          %307 = sbr.rel (%p305) target = $region36
        $region35: #{tpu_custom_call.1} parent=11 // pred_region
          _
        $region36: #{tpu_custom_call.1} parent=11 // pred_fallthru
          _
        // Predicated region
        $region37: #{tpu_custom_call.1} parent=11 // pred_check
          %p308 = pneg %p223
        $region38: #{tpu_custom_call.1} parent=11 // pred_check_branch
          %310 = sbr.rel (%p308) target = $region40
        $region39: #{tpu_custom_call.1} parent=11 // pred_region
          _
        $region40: #{tpu_custom_call.1} parent=11 // pred_fallthru
          _
      $region12: #{tpu_custom_call.1} parent=5 // pred_fallthru
        _
      %p311 = scmp.lt.s32.totalorder %s24, 2
      // Predicated region
      $region41: #{tpu_custom_call.1} parent=5 // pred_check
        %p312 = pneg %p311
      $region42: #{tpu_custom_call.1} parent=5 // pred_check_branch
        %314 = sbr.rel (%p312) target = $region44
      $region43: #{tpu_custom_call.1} parent=5 // pred_region
        // Predicated region
        $region45: #{tpu_custom_call.1} parent=43 // pred_check
          %p315 = pneg %p44
        $region46: #{tpu_custom_call.1} parent=43 // pred_check_branch
          %317 = sbr.rel (%p315) target = $region48
        $region47: #{tpu_custom_call.1} parent=43 // pred_region
          %p318 = scmp.lt.s32.totalorder %s24, 1
          %s319 = scalar_select %p318, %s24, 1
          %s320 = smul.addr %s319, 4
          %s321 = scalar_lea.vmem %s1, %s320
        $region48: #{tpu_custom_call.1} parent=43 // pred_fallthru
          _
        // Predicated region
        $region49: #{tpu_custom_call.1} parent=43 // pred_check
          %p322 = pneg %p133
        $region50: #{tpu_custom_call.1} parent=43 // pred_check_branch
          %324 = sbr.rel (%p322) target = $region52
        $region51: #{tpu_custom_call.1} parent=43 // pred_region
          %p325 = scmp.lt.s32.totalorder %s24, 1
          %s326 = scalar_select %p325, %s24, 1
          %s327 = smul.addr %s326, 4
          %s328 = scalar_lea.vmem %s5, %s327
        $region52: #{tpu_custom_call.1} parent=43 // pred_fallthru
          _
      $region44: #{tpu_custom_call.1} parent=5 // pred_fallthru
        _
      %p329 = scmp.le.s32.totalorder 1, %s24
      %p330 = scmp.lt.s32.totalorder %s24, 3
      %p331 = pnand %p329, %p330
      %p332 = pneg %p331
      // Predicated region
      $region53: #{tpu_custom_call.1} parent=5 // pred_check
        _
      $region54: #{tpu_custom_call.1} parent=5 // pred_check_branch
        %334 = sbr.rel (%p331) target = $region56
      $region55: #{tpu_custom_call.1} parent=5 // pred_region
        %s335 = ssub.s32 %s24, 1
        %p336 = scmp.lt.s32.totalorder %s29, 1
        %s337 = scalar_select %p336, %s29, 1
        %s338 = smul.addr %s337, 4
        %s339 = scalar_lea.vmem %s1, %s338
        %p340 = pneg %p50
        %p341 = pneg %p47
        %p342 = pneg %p71
        %p343 = pneg %p68
        %p344 = pneg %p92
        %p345 = pneg %p89
        %p346 = pneg %p113
        %p347 = pneg %p110
        %p348 = scmp.lt.s32.totalorder %s29, 1
        %s349 = scalar_select %p348, %s29, 1
        %s350 = smul.addr %s349, 4
        %s351 = scalar_lea.vmem %s5, %s350
        %p352 = pneg %p139
        %p353 = pneg %p136
        %p354 = pneg %p160
        %p355 = pneg %p157
        %p356 = pneg %p181
        %p357 = pneg %p178
        %p358 = pneg %p202
        %p359 = pneg %p199
        %p360 = pneg %p223
        %p361 = pneg %p220
        %p362 = pneg %p249
        %p363 = pneg %p246
        %p364 = scmp.lt.s32.totalorder %s29, 1
        %s365 = scalar_select %p364, %s29, 1
        %s366 = scalar_lea.vmem %s10, %s365
        %p367 = pneg %p275
        %p368 = pneg %p272
        %s369 = sand.u32 %s262, 1
        %s370 = scalar_lea.sflag [#allocation7], %s369
        %s371 = sand.u32 %s262, 1
        %s372 = smul.addr %s371, 8
        %s373 = scalar_lea.vmem [#allocation6], %s372
        %p374 = scmp.lt.s32.totalorder %s29, 1
        %s375 = scalar_select %p374, %s29, 1
        %s376 = smul.addr %s375, 4
        %s377 = scalar_lea.vmem %s1, %s376
        %p378 = scmp.lt.s32.totalorder %s29, 1
        %s379 = scalar_select %p378, %s29, 1
        %s380 = smul.addr %s379, 4
        %s381 = scalar_lea.vmem %s5, %s380
        %p382 = scmp.lt.s32.totalorder %s29, 1
        %s383 = scalar_select %p382, %s29, 1
        %s384 = scalar_lea.vmem %s10, %s383
        %v386 = vld [vmem:[%s2] sm:$0xf]
        %v387 = vld [vmem:[%s377] sm:$0xf]
        %vm388 = vcmask 64512
        %v390 = vsel %vm388, %v386, 0
        %vm392 = vcmask 1043456
        %v394 = vsel %vm392, %v387, 0
        %396 = vmatprep.subr.bf16.mxu0 0
        %397 = vmatpush1.bf16.msra.mxu0 %v394
        %398 = vmatprep.subr.bf16.mxu0 0
        %399 = vmatpush1.bf16.msra.mxu0 0
        %400 = vmatprep.subr.bf16.mxu0 0
        %401 = vmatpush1.bf16.msra.mxu0 0
        %402 = vmatprep.subr.bf16.mxu0 0
        %403 = vmatpush1.bf16.msra.mxu0 0
        %404 = vmatprep.subr.bf16.mxu0 0
        %405 = vmatpush1.bf16.msra.mxu0 0
        %406 = vmatprep.subr.bf16.mxu0 0
        %407 = vmatpush1.bf16.msra.mxu0 0
        %408 = vmatprep.subr.bf16.mxu0 0
        %409 = vmatpush1.bf16.msra.mxu0 0
        %410 = vmatprep.subr.bf16.mxu0 0
        %411 = vmatpush1.bf16.msra.mxu0 0
        %412 = vmatprep.subr.bf16.mxu0 0
        %413 = vmatpush1.bf16.msra.mxu0 0
        %414 = vmatprep.subr.bf16.mxu0 0
        %415 = vmatpush1.bf16.msra.mxu0 0
        %416 = vmatprep.subr.bf16.mxu0 0
        %417 = vmatpush1.bf16.msra.mxu0 0
        %418 = vmatprep.subr.bf16.mxu0 0
        %419 = vmatpush1.bf16.msra.mxu0 0
        %420 = vmatprep.subr.bf16.mxu0 0
        %421 = vmatpush1.bf16.msra.mxu0 0
        %422 = vmatprep.subr.bf16.mxu0 0
        %423 = vmatpush1.bf16.msra.mxu0 0
        %424 = vmatprep.subr.bf16.mxu0 0
        %425 = vmatpush1.bf16.msra.mxu0 0
        %426 = vmatprep.subr.bf16.mxu0 0
        %427 = vmatpush1.bf16.msra.mxu0 0
        %428 = vmatprep.mubr.bf16.mxu0 0
        %429 = vmatmul.mubr.bf16.gmra.mrb[0].mxu0 %v390
        %v430 = vpop.f32.mrb[0].mxu0
        %v431 = vadd.f32 0.0, %v430
        %v432 = vpop.f32.mrb[0].mxu0
        %v433 = vpop.f32.mrb[0].mxu0
        %v434 = vpop.f32.mrb[0].mxu0
        %435 = vdwg.mxu0
        %v436 = vpack.c.bf16 %v431, %v431
        %v437 = vld [vmem:[%s3] sm:$0xf]
        %v438 = vld [vmem:[%s3 + $0x4] sm:$0x1]
        %v439 = vld [vmem:[%s4] sm:$0x1]
        %v441 = vlaneseq
        %v442 = vshrl.u32 %v441, 7
        %v443 = vsub.s32 0, %v442
        %v444 = vrot.slane %v439, %v443
        %v448 = vunpack.c.l.b16 %v437
        %v449 = vunpack.c.l.b16 %v438
        %v450 = vpack.c.b16 %v449, %v448
        %vm451 = vcmask 80896
        %v453 = vsel %vm451, %v436, 0
        %vm455 = vcmask 1044480
        %v457 = vsel %vm455, %v450, 0
        %459 = vmatprep.subr.bf16.mxu0 0
        %460 = vmatpush1.bf16.msra.mxu0 %v457
        %461 = vmatprep.subr.bf16.mxu0 0
        %462 = vmatpush1.bf16.msra.mxu0 0
        %463 = vmatprep.subr.bf16.mxu0 0
        %464 = vmatpush1.bf16.msra.mxu0 0
        %465 = vmatprep.subr.bf16.mxu0 0
        %466 = vmatpush1.bf16.msra.mxu0 0
        %467 = vmatprep.subr.bf16.mxu0 0
        %468 = vmatpush1.bf16.msra.mxu0 0
        %469 = vmatprep.subr.bf16.mxu0 0
        %470 = vmatpush1.bf16.msra.mxu0 0
        %471 = vmatprep.subr.bf16.mxu0 0
        %472 = vmatpush1.bf16.msra.mxu0 0
        %473 = vmatprep.subr.bf16.mxu0 0
        %474 = vmatpush1.bf16.msra.mxu0 0
        %475 = vmatprep.subr.bf16.mxu0 0
        %476 = vmatpush1.bf16.msra.mxu0 0
        %477 = vmatprep.subr.bf16.mxu0 0
        %478 = vmatpush1.bf16.msra.mxu0 0
        %479 = vmatprep.subr.bf16.mxu0 0
        %480 = vmatpush1.bf16.msra.mxu0 0
        %481 = vmatprep.subr.bf16.mxu0 0
        %482 = vmatpush1.bf16.msra.mxu0 0
        %483 = vmatprep.subr.bf16.mxu0 0
        %484 = vmatpush1.bf16.msra.mxu0 0
        %485 = vmatprep.subr.bf16.mxu0 0
        %486 = vmatpush1.bf16.msra.mxu0 0
        %487 = vmatprep.subr.bf16.mxu0 0
        %488 = vmatpush1.bf16.msra.mxu0 0
        %489 = vmatprep.subr.bf16.mxu0 0
        %490 = vmatpush1.bf16.msra.mxu0 0
        %491 = vmatprep.mubr.bf16.mxu0 0
        %492 = vmatmul.mubr.bf16.gmra.mrb[0].mxu0 %v453
        %v493 = vpop.f32.mrb[0].mxu0
        %v494 = vadd.f32 %v444, %v493
        %v495 = vpop.f32.mrb[0].mxu0
        %v496 = vpop.f32.mrb[0].mxu0
        %v497 = vpop.f32.mrb[0].mxu0
        %498 = vdwg.mxu0
        %v499 = vmul.f32 %v494, 0.01
        %v500 = vmax.f32 %v494, %v499
        %501 = vst [vmem:[#allocation2] sm:$0xff] %v500
        %v502 = vld [vmem:[%s381] sm:$0xf]
        %v503 = vld [vmem:[%s6] sm:$0xf]
        %v504 = vld [vmem:[%s7] sm:$0x1]
        %v506 = vlaneseq
        %v507 = vshrl.u32 %v506, 7
        %v508 = vsub.s32 0, %v507
        %v509 = vrot.slane %v504, %v508
        %vm511 = vcmask 56320
        %v513 = vsel %vm511, %v502, 0
        %vm515 = vcmask 1042432
        %v516 = vsel %vm515, 4294967295, 65535
        %v517 = vsel %vm392, %v516, 0
        %v519 = vand.u32 %v503, %v517
        %521 = vmatprep.subr.bf16.mxu0 0
        %522 = vmatpush1.bf16.msra.mxu0 %v519
        %523 = vmatprep.subr.bf16.mxu0 0
        %524 = vmatpush1.bf16.msra.mxu0 0
        %525 = vmatprep.subr.bf16.mxu0 0
        %526 = vmatpush1.bf16.msra.mxu0 0
        %527 = vmatprep.subr.bf16.mxu0 0
        %528 = vmatpush1.bf16.msra.mxu0 0
        %529 = vmatprep.subr.bf16.mxu0 0
        %530 = vmatpush1.bf16.msra.mxu0 0
        %531 = vmatprep.subr.bf16.mxu0 0
        %532 = vmatpush1.bf16.msra.mxu0 0
        %533 = vmatprep.subr.bf16.mxu0 0
        %534 = vmatpush1.bf16.msra.mxu0 0
        %535 = vmatprep.subr.bf16.mxu0 0
        %536 = vmatpush1.bf16.msra.mxu0 0
        %537 = vmatprep.subr.bf16.mxu0 0
        %538 = vmatpush1.bf16.msra.mxu0 0
        %539 = vmatprep.subr.bf16.mxu0 0
        %540 = vmatpush1.bf16.msra.mxu0 0
        %541 = vmatprep.subr.bf16.mxu0 0
        %542 = vmatpush1.bf16.msra.mxu0 0
        %543 = vmatprep.subr.bf16.mxu0 0
        %544 = vmatpush1.bf16.msra.mxu0 0
        %545 = vmatprep.subr.bf16.mxu0 0
        %546 = vmatpush1.bf16.msra.mxu0 0
        %547 = vmatprep.subr.bf16.mxu0 0
        %548 = vmatpush1.bf16.msra.mxu0 0
        %549 = vmatprep.subr.bf16.mxu0 0
        %550 = vmatpush1.bf16.msra.mxu0 0
        %551 = vmatprep.subr.bf16.mxu0 0
        %552 = vmatpush1.bf16.msra.mxu0 0
        %553 = vmatprep.mubr.bf16.mxu0 0
        %554 = vmatmul.mubr.bf16.gmra.mrb[0].mxu0 %v513
        %v555 = vpop.f32.mrb[0].mxu0
        %v556 = vadd.f32 %v509, %v555
        %v557 = vpop.f32.mrb[0].mxu0
        %v558 = vpop.f32.mrb[0].mxu0
        %v559 = vpop.f32.mrb[0].mxu0
        %560 = vdwg.mxu0
        %v561 = vmul.f32 %v556, 0.01
        %v562 = vmax.f32 %v556, %v561
        %563 = vst [vmem:[%s373] sm:$0xff] %v562
        %s564 = sld [smem:[#allocation4]]
        %s565 = scalar_lea.vmem [#allocation2], %s564
        %v566 = vld [vmem:[%s565] sm:$0x1]
        %v567 = vpack.c.bf16 %v566, %v566
        %v568 = vld [vmem:[%s8] sm:$0xf]
        %v569 = vld [vmem:[%s8 + $0x4] sm:$0xf]
        %v570 = vld [vmem:[%s8 + $0x8] sm:$0xf]
        %v571 = vld [vmem:[%s8 + $0xc] sm:$0xf]
        %v572 = vld [vmem:[%s8 + $0x10] sm:$0xf]
        %v573 = vld [vmem:[%s8 + $0x14] sm:$0xf]
        %v574 = vld [vmem:[%s8 + $0x18] sm:$0xf]
        %v575 = vld [vmem:[%s8 + $0x1c] sm:$0xf]
        %v576 = vld [vmem:[%s8 + $0x20] sm:$0xf]
        %v577 = vld [vmem:[%s8 + $0x24] sm:$0xf]
        %v578 = vld [vmem:[%s8 + $0x28] sm:$0xf]
        %v579 = vld [vmem:[%s8 + $0x2c] sm:$0xf]
        %v580 = vld [vmem:[%s8 + $0x30] sm:$0xf]
        %v581 = vld [vmem:[%s8 + $0x34] sm:$0xf]
        %v582 = vld [vmem:[%s8 + $0x38] sm:$0xf]
        %v583 = vld [vmem:[%s8 + $0x3c] sm:$0xf]
        %v584 = vld [vmem:[#allocation5] sm:$0x1]
        %v601 = vunpack.c.l.b16 %v568
        %v602 = vunpack.c.l.b16 %v569
        %v603 = vunpack.c.l.b16 %v570
        %v604 = vunpack.c.l.b16 %v571
        %v605 = vunpack.c.l.b16 %v572
        %v606 = vunpack.c.l.b16 %v573
        %v607 = vunpack.c.l.b16 %v574
        %v608 = vunpack.c.l.b16 %v575
        %v609 = vunpack.c.l.b16 %v576
        %v610 = vunpack.c.l.b16 %v577
        %v611 = vunpack.c.l.b16 %v578
        %v612 = vunpack.c.l.b16 %v579
        %v613 = vunpack.c.l.b16 %v580
        %v614 = vunpack.c.l.b16 %v581
        %v615 = vunpack.c.l.b16 %v582
        %v616 = vunpack.c.l.b16 %v583
        %v617 = vpack.c.b16 %v602, %v601
        %v618 = vpack.c.b16 %v604, %v603
        %v619 = vpack.c.b16 %v606, %v605
        %v620 = vpack.c.b16 %v608, %v607
        %v621 = vpack.c.b16 %v610, %v609
        %v622 = vpack.c.b16 %v612, %v611
        %v623 = vpack.c.b16 %v614, %v613
        %v624 = vpack.c.b16 %v616, %v615
        %633 = vmatprep.subr.bf16.mxu0 0
        %634 = vmatpush1.bf16.msra.mxu0 %v617
        %635 = vmatprep.subr.bf16.mxu0 0
        %636 = vmatpush1.bf16.msra.mxu0 %v618
        %637 = vmatprep.subr.bf16.mxu0 0
        %638 = vmatpush1.bf16.msra.mxu0 %v619
        %639 = vmatprep.subr.bf16.mxu0 0
        %640 = vmatpush1.bf16.msra.mxu0 %v620
        %641 = vmatprep.subr.bf16.mxu0 0
        %642 = vmatpush1.bf16.msra.mxu0 %v621
        %643 = vmatprep.subr.bf16.mxu0 0
        %644 = vmatpush1.bf16.msra.mxu0 %v622
        %645 = vmatprep.subr.bf16.mxu0 0
        %646 = vmatpush1.bf16.msra.mxu0 %v623
        %647 = vmatprep.subr.bf16.mxu0 0
        %648 = vmatpush1.bf16.msra.mxu0 %v624
        %649 = vmatprep.subr.bf16.mxu0 0
        %650 = vmatpush1.bf16.msra.mxu0 0
        %651 = vmatprep.subr.bf16.mxu0 0
        %652 = vmatpush1.bf16.msra.mxu0 0
        %653 = vmatprep.subr.bf16.mxu0 0
        %654 = vmatpush1.bf16.msra.mxu0 0
        %655 = vmatprep.subr.bf16.mxu0 0
        %656 = vmatpush1.bf16.msra.mxu0 0
        %657 = vmatprep.subr.bf16.mxu0 0
        %658 = vmatpush1.bf16.msra.mxu0 0
        %659 = vmatprep.subr.bf16.mxu0 0
        %660 = vmatpush1.bf16.msra.mxu0 0
        %661 = vmatprep.subr.bf16.mxu0 0
        %662 = vmatpush1.bf16.msra.mxu0 0
        %663 = vmatprep.subr.bf16.mxu0 0
        %664 = vmatpush1.bf16.msra.mxu0 0
        %665 = vmatprep.mubr.bf16.mxu0 0
        %666 = vmatmul.mubr.bf16.gmra.mrb[0].mxu0 %v567
        %v667 = vpop.f32.mrb[0].mxu0
        %v668 = vadd.f32 %v584, %v667
        %v669 = vpop.f32.mrb[0].mxu0
        %v670 = vpop.f32.mrb[0].mxu0
        %v671 = vpop.f32.mrb[0].mxu0
        %672 = vdwg.mxu0
        %vm673 = vcmask 0
        %674 = vst.msk [vmem:[%s384] sm:$0x1] %vm673, %v668
        %p675 = scmp.lt.s32.totalorder %s29, 1
        %s676 = scalar_select %p675, %s29, 1
        %s677 = scalar_lea.vmem %s10, %s676
        %s678 = sand.u32 %s262, 1
        %s679 = scalar_lea.sflag [#allocation7], %s678
        %s680 = sand.u32 %s262, 1
        %s681 = smul.addr %s680, 8
        %s682 = scalar_lea.vmem [#allocation6], %s681
        // Predicated region
        $region57: #{tpu_custom_call.1} parent=55 // pred_check
          %p683 = pneg %p246
        $region58: #{tpu_custom_call.1} parent=55 // pred_check_branch
          %685 = sbr.rel (%p683) target = $region60
        $region59: #{tpu_custom_call.1} parent=55 // pred_region
          _
        $region60: #{tpu_custom_call.1} parent=55 // pred_fallthru
          _
        // Predicated region
        $region61: #{tpu_custom_call.1} parent=55 // pred_check
          %p686 = pneg %p272
        $region62: #{tpu_custom_call.1} parent=55 // pred_check_branch
          %688 = sbr.rel (%p686) target = $region64
        $region63: #{tpu_custom_call.1} parent=55 // pred_region
          %s690 = ssub.s32 128, 128
          %691 = vsyncadd %s679, %s690
          %s692 = smul.addr %s29, 128
          %s693 = scalar_lea.hbm %s11, %s692
          %s695 = sshll.u32 %s682, 4
          %s696 = int_to_ptr.vmem [resolvable:$true] %s695
          %698 = dma.vmem_to_hbm [thread:$0]  %s696, 128, %s693, %s679
        $region64: #{tpu_custom_call.1} parent=55 // pred_fallthru
          _
      $region56: #{tpu_custom_call.1} parent=5 // pred_fallthru
        _
      %p699 = scmp.le.s32.totalorder 2, %s24
      // Predicated region
      $region65: #{tpu_custom_call.1} parent=5 // pred_check
        %p700 = pneg %p699
      $region66: #{tpu_custom_call.1} parent=5 // pred_check_branch
        %702 = sbr.rel (%p700) target = $region68
      $region67: #{tpu_custom_call.1} parent=5 // pred_region
        %s703 = ssub.s32 %s24, 2
        // Predicated region
        $region69: #{tpu_custom_call.1} parent=67 // pred_check
          %p704 = pneg %p252
        $region70: #{tpu_custom_call.1} parent=67 // pred_check_branch
          %706 = sbr.rel (%p704) target = $region72
        $region71: #{tpu_custom_call.1} parent=67 // pred_region
          %p707 = scmp.lt.s32.totalorder %s30, 1
          %s708 = scalar_select %p707, %s30, 1
          %s709 = scalar_lea.vmem %s10, %s708
        $region72: #{tpu_custom_call.1} parent=67 // pred_fallthru
          _
        // Predicated region
        $region73: #{tpu_custom_call.1} parent=67 // pred_check
          %p710 = pneg %p278
        $region74: #{tpu_custom_call.1} parent=67 // pred_check_branch
          %712 = sbr.rel (%p710) target = $region76
        $region75: #{tpu_custom_call.1} parent=67 // pred_region
          %s713 = sand.u32 %s263, 1
          %s714 = scalar_lea.sflag [#allocation7], %s713
          %s715 = sand.u32 %s263, 1
          %s716 = smul.addr %s715, 8
          %s717 = scalar_lea.vmem [#allocation6], %s716
          %718 = dma.done %s714, 128
        $region76: #{tpu_custom_call.1} parent=67 // pred_fallthru
          _
      $region68: #{tpu_custom_call.1} parent=5 // pred_fallthru
        _
    $region6: #{tpu_custom_call.1} parent=1 // loop_footer
      %s28 = sadd.s32 1, %s24
    $region7: #{tpu_custom_call.1} parent=1 // loop_footer_branch
      %23 = sbr.rel target = $region3
    $region8: #{tpu_custom_call.1} parent=1 // loop_exit
      _
    %719 = vsyncpa [#allocation7], 1
    %s720 = scalar_lea.sflag [#allocation7], 1
    %721 = vsyncpa %s720, 1

</llo_original>
